<compile_context>
chip_gen: v5e
topology: v5e:2x2
jax: 0.10.0
libtpu: 0.0.40
codegen_flags: <defaults>
</compile_context>

<pallas_src>
import functools

import jax
import jax.numpy as jnp
from jax.experimental import pallas as pl
from jax.experimental.pallas import tpu as pltpu

DILATIONS = (8, 4, 2, 1)   # layer order inside the Decoder's nn.Sequential


def decoder_kernel(alphas_ref, bf_ref, x_ref, wd_ref, bd_ref, wf_ref,
                   out_ref, hpad_ref, *, dilations, stride, compute_dtype):
    """One grid step = one block of batch elements.

    alphas_ref : SMEM f32[4]            PReLU slopes (one per dilated layer)
    bf_ref     : SMEM f32[1]            final ConvTranspose1d bias
    x_ref      : VMEM f32[Bb, L, N]     input block, channels-last (N NOT padded in HBM)
    wd_ref     : VMEM cd[4, 3C, C]      stacked im2col tap weights [W0; W1; W2] per layer
    bd_ref     : VMEM f32[4, C]         per-layer biases (zero in padded channels)
    wf_ref     : VMEM cd[C, K]          final transposed-conv weight (in-channel x tap)
    out_ref    : VMEM f32[Bb, Lf, S]    output frames, Lf = L + K//S - 1, Lf*S = L_out
    hpad_ref   : VMEM f32[Bb, L+2P, C]  zero-padded activation scratch, P = max dilation
    """
    Bb, L, N = x_ref.shape
    _, Tp, C = hpad_ref.shape
    P = (Tp - L) // 2
    K = wf_ref.shape[1]
    S = stride
    R = K // S
    rows = Bb * L

    # Zero only the time pad bands; centre rows are fully rewritten below.  Padded channel
    # lanes of the centre are explicitly zeroed so stale VMEM never reaches the MXU.
    hpad_ref[:, :P, :] = jnp.zeros((Bb, P, C), jnp.float32)
    hpad_ref[:, P + L:, :] = jnp.zeros((Bb, P, C), jnp.float32)
    hpad_ref[:, P:P + L, :N] = x_ref[...]
    if C > N:
        hpad_ref[:, P:P + L, N:] = jnp.zeros((Bb, L, C - N), jnp.float32)

    # --- 4 dilated transposed convs (k=3, stride 1, "same" length) + PReLU ----------------
    for i, d in enumerate(dilations):
        # im2col operand [x(t+d) | x(t) | x(t-d)] : lane-aligned concat of C=128 slabs.
        op = jnp.concatenate(
            [hpad_ref[:, P + d:P + d + L, :],
             hpad_ref[:, P:P + L, :],
             hpad_ref[:, P - d:P - d + L, :]], axis=-1)            # (Bb, L, 3C)
        op = op.reshape(rows, 3 * C).astype(compute_dtype)
        z = jnp.dot(op, wd_ref[i], preferred_element_type=jnp.float32)   # (rows, C), one matmul
        y = z.reshape(Bb, L, C) + bd_ref[i:i + 1, :]
        a = alphas_ref[i]
        h = jnp.where(y > 0, y, a * y)                             # PReLU, scalar slope (f32)
        hpad_ref[:, P:P + L, :] = h

    # --- final ConvTranspose1d(N, 1, K, stride=S): projection + overlap-add ---------------
    h2 = hpad_ref[:, P:P + L, :].reshape(rows, C).astype(compute_dtype)   # valid rows only
    p = jnp.dot(h2, wf_ref[...], preferred_element_type=jnp.float32)      # (rows, K)
    p = p.reshape(Bb, L, K)

    # out_ref is the VMEM-resident output block: initialise once with the bias and do the
    # R-way overlap-add in place (a single HBM writeback DMA happens after the body).
    out_ref[...] = jnp.zeros_like(out_ref) + bf_ref[0]
    for j in range(R):   # output frame (t + j) receives taps [j*S, (j+1)*S) of input frame t
        out_ref[:, j:j + L, :] = out_ref[:, j:j + L, :] + p[:, :, j * S:(j + 1) * S]
    # TODO(synk): lane-dense flat (Bb, L_out) store would need a minor-dim value reshape
    # in-kernel; the free contiguous flatten happens in the wrapper instead.


def _round_up(v, m):
    return (v + m - 1) // m * m


def init_params(key, N, kernel_size):
    nl = len(DILATIONS)
    ks = jax.random.split(key, 2 * nl + 2)
    wd_raw = [0.1 * jax.random.normal(ks[i], (N, N, 3), jnp.float32) for i in range(nl)]
    bd = jnp.stack([0.1 * jax.random.normal(ks[nl + i], (N,), jnp.float32) for i in range(nl)])
    wf = 0.1 * jax.random.normal(ks[2 * nl], (N, 1, kernel_size), jnp.float32)
    bf = 0.1 * jax.random.normal(ks[2 * nl + 1], (1,), jnp.float32)
    alphas = jnp.full((nl,), 0.25, jnp.float32)        # nn.PReLU() default init
    return dict(wd_raw=wd_raw, bd=bd, wf=wf, bf=bf, alphas=alphas)


def _pick_n_blocks(B, per_elem_bytes, weight_bytes, budget_bytes):
    """Smallest divisor of B giving >= min(B, 4) grid steps whose block fits the VMEM budget."""
    fallback = None
    for nb in range(1, B + 1):
        if B % nb:
            continue
        fits = (B // nb) * per_elem_bytes + weight_bytes <= budget_bytes
        if fits and fallback is None:
            fallback = nb
        if fits and nb >= min(B, 4):
            return nb
    # TODO(synk): add a halo-tiled time grid axis when even a single batch element exceeds
    # the VMEM budget (very long L).
    return fallback if fallback is not None else B


def decoder_forward(x, params, kernel_size, stride, compute_dtype=jnp.bfloat16):
    """x: [B, N, L] -> [B, L_out]; matches PyTorch Decoder.forward for batched input."""
    # TODO(synk): the unbatched (x: N x L) squeeze branch of forward() is not wired up.
    B, N, L = x.shape
    K, S = int(kernel_size), int(stride)
    assert K % S == 0, "overlap-add path assumes kernel_size % stride == 0 (module default 16/8)"
    # TODO(synk): kernel_size % stride != 0 needs a different overlap-add split.
    R = K // S
    Lf = L + R - 1
    L_out = (L - 1) * S + K                        # == Lf * S
    P = max(DILATIONS)
    Tp = L + 2 * P
    C = _round_up(N, 128)                          # on-chip lane-dense channel count

    # channels-last input; channels are NOT padded in HBM (4x less input DMA for N=32)
    xcl = jnp.transpose(x, (0, 2, 1))              # (B, L, N)

    # PyTorch ConvTranspose1d weight is [in, out, k]; tap k multiplies x[t + d*(1-k)]:
    #   y[t] = W0 x[t+d] + W1 x[t] + W2 x[t-d].
    # Stack the taps along the contraction axis (im2col): W_layer = [W0; W1; W2]  (3C, C).
    wd = []
    for w in params["wd_raw"]:
        taps = [jnp.pad(w[:, :, k], ((0, C - N), (0, C - N))) for k in range(3)]
        wd.append(jnp.concatenate(taps, axis=0))
    wd = jnp.stack(wd, axis=0).astype(compute_dtype)                        # (4, 3C, C)
    bd = jnp.pad(params["bd"], ((0, 0), (0, C - N))).astype(jnp.float32)    # (4, C)
    wf = jnp.pad(params["wf"][:, 0, :], ((0, C - N), (0, 0))).astype(compute_dtype)  # (C, K)
    alphas = params["alphas"].astype(jnp.float32)
    bf = params["bf"].astype(jnp.float32)

    # VMEM budget -> number of batch blocks (>= min(B,4) grid steps for pipelining / 2 TCs)
    ew = jnp.dtype(compute_dtype).itemsize
    per_elem = (Tp * C * 4               # hpad scratch (f32)
                + L * 3 * C * (4 + ew)   # im2col operand (f32 gather + compute-dtype copy)
                + L * C * 4              # layer result
                + 2 * L * N * 4          # x block (double-buffered)
                + 2 * Lf * S * 4)        # out block (double-buffered)
    weight_bytes = int(wd.size) * ew + int(wf.size) * ew + int(bd.size) * 4
    n_blocks = _pick_n_blocks(B, per_elem, weight_bytes, budget_bytes=24 << 20)
    Bb = B // n_blocks

    vmem_need = Bb * per_elem + weight_bytes
    vmem_limit = int(min(max(2 * vmem_need, 32 << 20), 64 << 20))

    flops = 2 * B * L * (3 * C) * C * len(DILATIONS) + 2 * B * L * C * K
    bytes_accessed = int(x.size) * 4 + int(wd.size) * ew + int(wf.size) * ew \
        + int(bd.size) * 4 + int(alphas.size) * 4 + int(bf.size) * 4 + B * Lf * S * 4

    kernel = functools.partial(decoder_kernel, dilations=DILATIONS, stride=S,
                               compute_dtype=compute_dtype)

    out_frames = pl.pallas_call(
        kernel,
        out_shape=jax.ShapeDtypeStruct((B, Lf, S), jnp.float32),
        grid_spec=pltpu.PrefetchScalarGridSpec(
            num_scalar_prefetch=0,
            grid=(n_blocks,),
            in_specs=[
                pl.BlockSpec(memory_space=pltpu.MemorySpace.SMEM),              # alphas
                pl.BlockSpec(memory_space=pltpu.MemorySpace.SMEM),              # bf
                pl.BlockSpec((Bb, L, N), lambda b: (b, 0, 0)),                  # x (channels-last)
                pl.BlockSpec((len(DILATIONS), 3 * C, C), lambda b: (0, 0, 0)),  # wd
                pl.BlockSpec((len(DILATIONS), C), lambda b: (0, 0)),            # bd
                pl.BlockSpec((C, K), lambda b: (0, 0)),                         # wf
            ],
            out_specs=pl.BlockSpec((Bb, Lf, S), lambda b: (b, 0, 0)),
            scratch_shapes=[pltpu.VMEM((Bb, Tp, C), jnp.float32)],
        ),
        compiler_params=pltpu.CompilerParams(
            dimension_semantics=("parallel",),
            vmem_limit_bytes=vmem_limit),
        cost_estimate=pl.CostEstimate(flops=int(flops), transcendentals=0,
                                      bytes_accessed=int(bytes_accessed)),
    )(alphas, bf, xcl, wd, bd, wf)

    # (B, Lf, S) is contiguous with Lf*S == L_out: flattening is a free metadata reshape.
    return out_frames.reshape(B, L_out)


decoder_forward_jit = jax.jit(
    decoder_forward, static_argnames=("kernel_size", "stride", "compute_dtype"))


# ----------------------------- pure-JAX reference ---------------------------------------
def _conv_transpose1d_ref(x, w, b, stride, padding, dilation):
    """From-definition ConvTranspose1d.  x: (B, Cin, L), w: (Cin, Cout, K) [PyTorch layout]."""
    Bx, Cin, L = x.shape
    _, Cout, K = w.shape
    L_out = (L - 1) * stride - 2 * padding + dilation * (K - 1) + 1
    y = jnp.zeros((Bx, Cout, L_out + 2 * padding), jnp.float32)
    for k in range(K):
        contrib = jnp.einsum('bct,co->bot', x, w[:, :, k])
        start = k * dilation
        y = y.at[:, :, start:start + (L - 1) * stride + 1:stride].add(contrib)
    if padding > 0:
        y = y[:, :, padding:-padding]
    if b is not None:
        y = y + b[None, :, None]
    return y


def decoder_reference(x, params, kernel_size, stride):
    h = x
    for i, d in enumerate(DILATIONS):
        h = _conv_transpose1d_ref(h, params["wd_raw"][i], params["bd"][i], 1, d, d)
        a = params["alphas"][i]
        h = jnp.where(h > 0, h, a * h)
    y = _conv_transpose1d_ref(h, params["wf"], params["bf"], stride, 0, 1)   # (B, 1, L_out)
    return jnp.squeeze(y, axis=1)


if __name__ == "__main__":
    # Small shapes consistent with the module: x is [B, N, L]; defaults K=16, S=8.
    B, N, L = 2, 32, 16
    kernel_size, stride = 16, 8

    key = jax.random.PRNGKey(0)
    k_param, k_x = jax.random.split(key)
    params = init_params(k_param, N, kernel_size)
    x = jax.random.normal(k_x, (B, N, L), jnp.float32)

    ref = decoder_reference(x, params, kernel_size, stride)
    expected_len = (L - 1) * stride + kernel_size

    # exact-path validation (f32 matmuls)
    out_f32 = jax.block_until_ready(decoder_forward_jit(
        x, params, kernel_size=kernel_size, stride=stride, compute_dtype=jnp.float32))
    assert out_f32.shape == ref.shape == (B, expected_len), (out_f32.shape, ref.shape)
    err32 = float(jnp.max(jnp.abs(out_f32 - ref)))
    assert jnp.allclose(out_f32, ref, atol=2e-2, rtol=2e-2), err32

    # production path (bf16 MXU matmuls, f32 accumulation / epilogue) — looser tolerance
    out_bf16 = jax.block_until_ready(decoder_forward_jit(
        x, params, kernel_size=kernel_size, stride=stride))
    errbf = float(jnp.max(jnp.abs(out_bf16 - ref)))
    assert out_bf16.shape == (B, expected_len), out_bf16.shape
    assert jnp.allclose(out_bf16, ref, atol=1e-1, rtol=1e-1), errbf

    print("KERNEL_OK")
</pallas_src>

<mosaic_0001>
module attributes {stable_mosaic.version = 11 : i64} {
  func.func @decoder_kernel(%arg0: i32, %arg1: memref<4xf32, #tpu.memory_space<smem>>, %arg2: memref<1xf32, #tpu.memory_space<smem>>, %arg3: memref<1x16x32xf32, #tpu.memory_space<vmem>>, %arg4: memref<4x384x128xf32, #tpu.memory_space<vmem>>, %arg5: memref<4x128xf32, #tpu.memory_space<vmem>>, %arg6: memref<128x16xf32, #tpu.memory_space<vmem>>, %arg7: memref<1x17x8xf32, #tpu.memory_space<vmem>>, %arg8: memref<1x32x128xf32, #tpu.memory_space<vmem>>) attributes {dimension_semantics = [#tpu.dimension_semantics<parallel>], iteration_bounds = array<i64: 2>, scalar_prefetch = 0 : i64, scratch_operands = 1 : i64, tpu.core_type = #tpu.core_type<tc>, window_params = [{transform_indices = @transform_0, window_bounds = array<i64: 4>}, {transform_indices = @transform_1, window_bounds = array<i64: 1>}, {transform_indices = @transform_2, window_bounds = array<i64: 1, 16, 32>}, {pipeline_mode = #tpu.pipeline_mode<synchronous>, transform_indices = @transform_3, window_bounds = array<i64: 4, 384, 128>}, {pipeline_mode = #tpu.pipeline_mode<synchronous>, transform_indices = @transform_4, window_bounds = array<i64: 4, 128>}, {pipeline_mode = #tpu.pipeline_mode<synchronous>, transform_indices = @transform_5, window_bounds = array<i64: 128, 16>}, {transform_indices = @transform_6, window_bounds = array<i64: 1, 17, 8>}]} {
    %cst = arith.constant 0.000000e+00 : f32
    %0 = vector.broadcast %cst : f32 to vector<1x8x128xf32>
    %c0 = arith.constant 0 : index
    %c0_0 = arith.constant 0 : index
    %c0_1 = arith.constant 0 : index
    %1 = vector.load %arg8[%c0, %c0_0, %c0_1] : memref<1x32x128xf32, #tpu.memory_space<vmem>>, vector<1x8x128xf32>
    tpu.vector_store %arg8[%c0, %c0_0, %c0_1], %0 {strides = array<i32>} : memref<1x32x128xf32, #tpu.memory_space<vmem>>, vector<1x8x128xf32>,
    %cst_2 = arith.constant 0.000000e+00 : f32
    %2 = vector.broadcast %cst_2 : f32 to vector<1x8x128xf32>
    %c0_3 = arith.constant 0 : index
    %c24 = arith.constant 24 : index
    %c0_4 = arith.constant 0 : index
    %3 = vector.load %arg8[%c0_3, %c24, %c0_4] : memref<1x32x128xf32, #tpu.memory_space<vmem>>, vector<1x8x128xf32>
    tpu.vector_store %arg8[%c0_3, %c24, %c0_4], %2 {strides = array<i32>} : memref<1x32x128xf32, #tpu.memory_space<vmem>>, vector<1x8x128xf32>,
    %c0_5 = arith.constant 0 : index
    %c0_6 = arith.constant 0 : index
    %c0_7 = arith.constant 0 : index
    %4 = vector.load %arg3[%c0_5, %c0_6, %c0_7] : memref<1x16x32xf32, #tpu.memory_space<vmem>>, vector<1x16x32xf32>
    %c0_8 = arith.constant 0 : index
    %c8 = arith.constant 8 : index
    %c0_9 = arith.constant 0 : index
    %5 = vector.load %arg8[%c0_8, %c8, %c0_9] : memref<1x32x128xf32, #tpu.memory_space<vmem>>, vector<1x16x32xf32>
    tpu.vector_store %arg8[%c0_8, %c8, %c0_9], %4 {strides = array<i32>} : memref<1x32x128xf32, #tpu.memory_space<vmem>>, vector<1x16x32xf32>,
    %cst_10 = arith.constant 0.000000e+00 : f32
    %6 = vector.broadcast %cst_10 : f32 to vector<1x16x96xf32>
    %c0_11 = arith.constant 0 : index
    %c8_12 = arith.constant 8 : index
    %c32 = arith.constant 32 : index
    %7 = vector.load %arg8[%c0_11, %c8_12, %c32] : memref<1x32x128xf32, #tpu.memory_space<vmem>>, vector<1x16x96xf32>
    tpu.vector_store %arg8[%c0_11, %c8_12, %c32], %6 {strides = array<i32>} : memref<1x32x128xf32, #tpu.memory_space<vmem>>, vector<1x16x96xf32>,
    %c0_13 = arith.constant 0 : index
    %c16 = arith.constant 16 : index
    %c0_14 = arith.constant 0 : index
    %8 = vector.load %arg8[%c0_13, %c16, %c0_14] : memref<1x32x128xf32, #tpu.memory_space<vmem>>, vector<1x16x128xf32>
    %c0_15 = arith.constant 0 : index
    %c8_16 = arith.constant 8 : index
    %c0_17 = arith.constant 0 : index
    %9 = vector.load %arg8[%c0_15, %c8_16, %c0_17] : memref<1x32x128xf32, #tpu.memory_space<vmem>>, vector<1x16x128xf32>
    %c0_18 = arith.constant 0 : index
    %c0_19 = arith.constant 0 : index
    %c0_20 = arith.constant 0 : index
    %10 = vector.load %arg8[%c0_18, %c0_19, %c0_20] : memref<1x32x128xf32, #tpu.memory_space<vmem>>, vector<1x16x128xf32>
    %11 = tpu.concatenate %8, %9, %10 in 2 : vector<1x16x128xf32>, vector<1x16x128xf32>, vector<1x16x128xf32> -> vector<1x16x384xf32>
    %12 = vector.shape_cast %11 : vector<1x16x384xf32> to vector<16x384xf32>
    %c0_21 = arith.constant 0 : index
    %c0_22 = arith.constant 0 : index
    %c0_23 = arith.constant 0 : index
    %13 = vector.load %arg4[%c0_21, %c0_22, %c0_23] : memref<4x384x128xf32, #tpu.memory_space<vmem>>, vector<1x384x128xf32>
    %14 = vector.shape_cast %13 : vector<1x384x128xf32> to vector<384x128xf32>
    %cst_24 = arith.constant dense<0.000000e+00> : vector<16x128xf32>
    %15 = tpu.matmul %12, %14, %cst_24 {dimension_numbers = #tpu.dot_dimension_numbers<[1], [0], [0], [1], [0, 0, 1, 1], [], []>} : vector<16x384xf32>, vector<384x128xf32>, vector<16x128xf32> -> vector<16x128xf32>
    %16 = vector.shape_cast %15 : vector<16x128xf32> to vector<1x16x128xf32>
    %c0_25 = arith.constant 0 : index
    %c0_26 = arith.constant 0 : index
    %17 = vector.load %arg5[%c0_25, %c0_26] : memref<4x128xf32, #tpu.memory_space<vmem>>, vector<1x128xf32>
    %18 = vector.shape_cast %17 : vector<1x128xf32> to vector<1x1x128xf32>
    %19 = vector.broadcast %18 : vector<1x1x128xf32> to vector<1x16x128xf32>
    %20 = arith.addf %16, %19 : vector<1x16x128xf32>
    %c0_27 = arith.constant 0 : index
    %21 = memref.load %arg1[%c0_27] : memref<4xf32, #tpu.memory_space<smem>>
    %cst_28 = arith.constant 0.000000e+00 : f32
    %22 = vector.broadcast %cst_28 : f32 to vector<1x16x128xf32>
    %23 = arith.cmpf ogt, %20, %22 : vector<1x16x128xf32>
    %24 = vector.broadcast %21 : f32 to vector<1x16x128xf32>
    %25 = arith.mulf %24, %20 : vector<1x16x128xf32>
    %26 = arith.select %23, %20, %25 : vector<1x16x128xi1>, vector<1x16x128xf32>
    %c0_29 = arith.constant 0 : index
    %c8_30 = arith.constant 8 : index
    %c0_31 = arith.constant 0 : index
    %27 = vector.load %arg8[%c0_29, %c8_30, %c0_31] : memref<1x32x128xf32, #tpu.memory_space<vmem>>, vector<1x16x128xf32>
    tpu.vector_store %arg8[%c0_29, %c8_30, %c0_31], %26 {strides = array<i32>} : memref<1x32x128xf32, #tpu.memory_space<vmem>>, vector<1x16x128xf32>,
    %c0_32 = arith.constant 0 : index
    %c12 = arith.constant 12 : index
    %c0_33 = arith.constant 0 : index
    %28 = vector.load %arg8[%c0_32, %c12, %c0_33] : memref<1x32x128xf32, #tpu.memory_space<vmem>>, vector<1x16x128xf32>
    %c0_34 = arith.constant 0 : index
    %c8_35 = arith.constant 8 : index
    %c0_36 = arith.constant 0 : index
    %29 = vector.load %arg8[%c0_34, %c8_35, %c0_36] : memref<1x32x128xf32, #tpu.memory_space<vmem>>, vector<1x16x128xf32>
    %c0_37 = arith.constant 0 : index
    %c4 = arith.constant 4 : index
    %c0_38 = arith.constant 0 : index
    %30 = vector.load %arg8[%c0_37, %c4, %c0_38] : memref<1x32x128xf32, #tpu.memory_space<vmem>>, vector<1x16x128xf32>
    %31 = tpu.concatenate %28, %29, %30 in 2 : vector<1x16x128xf32>, vector<1x16x128xf32>, vector<1x16x128xf32> -> vector<1x16x384xf32>
    %32 = vector.shape_cast %31 : vector<1x16x384xf32> to vector<16x384xf32>
    %c1 = arith.constant 1 : index
    %c0_39 = arith.constant 0 : index
    %c0_40 = arith.constant 0 : index
    %33 = vector.load %arg4[%c1, %c0_39, %c0_40] : memref<4x384x128xf32, #tpu.memory_space<vmem>>, vector<1x384x128xf32>
    %34 = vector.shape_cast %33 : vector<1x384x128xf32> to vector<384x128xf32>
    %cst_41 = arith.constant dense<0.000000e+00> : vector<16x128xf32>
    %35 = tpu.matmul %32, %34, %cst_41 {dimension_numbers = #tpu.dot_dimension_numbers<[1], [0], [0], [1], [0, 0, 1, 1], [], []>} : vector<16x384xf32>, vector<384x128xf32>, vector<16x128xf32> -> vector<16x128xf32>
    %36 = vector.shape_cast %35 : vector<16x128xf32> to vector<1x16x128xf32>
    %c1_42 = arith.constant 1 : index
    %c0_43 = arith.constant 0 : index
    %37 = vector.load %arg5[%c1_42, %c0_43] : memref<4x128xf32, #tpu.memory_space<vmem>>, vector<1x128xf32>
    %38 = vector.shape_cast %37 : vector<1x128xf32> to vector<1x1x128xf32>
    %39 = vector.broadcast %38 : vector<1x1x128xf32> to vector<1x16x128xf32>
    %40 = arith.addf %36, %39 : vector<1x16x128xf32>
    %c1_44 = arith.constant 1 : index
    %41 = memref.load %arg1[%c1_44] : memref<4xf32, #tpu.memory_space<smem>>
    %cst_45 = arith.constant 0.000000e+00 : f32
    %42 = vector.broadcast %cst_45 : f32 to vector<1x16x128xf32>
    %43 = arith.cmpf ogt, %40, %42 : vector<1x16x128xf32>
    %44 = vector.broadcast %41 : f32 to vector<1x16x128xf32>
    %45 = arith.mulf %44, %40 : vector<1x16x128xf32>
    %46 = arith.select %43, %40, %45 : vector<1x16x128xi1>, vector<1x16x128xf32>
    %c0_46 = arith.constant 0 : index
    %c8_47 = arith.constant 8 : index
    %c0_48 = arith.constant 0 : index
    %47 = vector.load %arg8[%c0_46, %c8_47, %c0_48] : memref<1x32x128xf32, #tpu.memory_space<vmem>>, vector<1x16x128xf32>
    tpu.vector_store %arg8[%c0_46, %c8_47, %c0_48], %46 {strides = array<i32>} : memref<1x32x128xf32, #tpu.memory_space<vmem>>, vector<1x16x128xf32>,
    %c0_49 = arith.constant 0 : index
    %c10 = arith.constant 10 : index
    %c0_50 = arith.constant 0 : index
    %48 = vector.load %arg8[%c0_49, %c10, %c0_50] : memref<1x32x128xf32, #tpu.memory_space<vmem>>, vector<1x16x128xf32>
    %c0_51 = arith.constant 0 : index
    %c8_52 = arith.constant 8 : index
    %c0_53 = arith.constant 0 : index
    %49 = vector.load %arg8[%c0_51, %c8_52, %c0_53] : memref<1x32x128xf32, #tpu.memory_space<vmem>>, vector<1x16x128xf32>
    %c0_54 = arith.constant 0 : index
    %c6 = arith.constant 6 : index
    %c0_55 = arith.constant 0 : index
    %50 = vector.load %arg8[%c0_54, %c6, %c0_55] : memref<1x32x128xf32, #tpu.memory_space<vmem>>, vector<1x16x128xf32>
    %51 = tpu.concatenate %48, %49, %50 in 2 : vector<1x16x128xf32>, vector<1x16x128xf32>, vector<1x16x128xf32> -> vector<1x16x384xf32>
    %52 = vector.shape_cast %51 : vector<1x16x384xf32> to vector<16x384xf32>
    %c2 = arith.constant 2 : index
    %c0_56 = arith.constant 0 : index
    %c0_57 = arith.constant 0 : index
    %53 = vector.load %arg4[%c2, %c0_56, %c0_57] : memref<4x384x128xf32, #tpu.memory_space<vmem>>, vector<1x384x128xf32>
    %54 = vector.shape_cast %53 : vector<1x384x128xf32> to vector<384x128xf32>
    %cst_58 = arith.constant dense<0.000000e+00> : vector<16x128xf32>
    %55 = tpu.matmul %52, %54, %cst_58 {dimension_numbers = #tpu.dot_dimension_numbers<[1], [0], [0], [1], [0, 0, 1, 1], [], []>} : vector<16x384xf32>, vector<384x128xf32>, vector<16x128xf32> -> vector<16x128xf32>
    %56 = vector.shape_cast %55 : vector<16x128xf32> to vector<1x16x128xf32>
    %c2_59 = arith.constant 2 : index
    %c0_60 = arith.constant 0 : index
    %57 = vector.load %arg5[%c2_59, %c0_60] : memref<4x128xf32, #tpu.memory_space<vmem>>, vector<1x128xf32>
    %58 = vector.shape_cast %57 : vector<1x128xf32> to vector<1x1x128xf32>
    %59 = vector.broadcast %58 : vector<1x1x128xf32> to vector<1x16x128xf32>
    %60 = arith.addf %56, %59 : vector<1x16x128xf32>
    %c2_61 = arith.constant 2 : index
    %61 = memref.load %arg1[%c2_61] : memref<4xf32, #tpu.memory_space<smem>>
    %cst_62 = arith.constant 0.000000e+00 : f32
    %62 = vector.broadcast %cst_62 : f32 to vector<1x16x128xf32>
    %63 = arith.cmpf ogt, %60, %62 : vector<1x16x128xf32>
    %64 = vector.broadcast %61 : f32 to vector<1x16x128xf32>
    %65 = arith.mulf %64, %60 : vector<1x16x128xf32>
    %66 = arith.select %63, %60, %65 : vector<1x16x128xi1>, vector<1x16x128xf32>
    %c0_63 = arith.constant 0 : index
    %c8_64 = arith.constant 8 : index
    %c0_65 = arith.constant 0 : index
    %67 = vector.load %arg8[%c0_63, %c8_64, %c0_65] : memref<1x32x128xf32, #tpu.memory_space<vmem>>, vector<1x16x128xf32>
    tpu.vector_store %arg8[%c0_63, %c8_64, %c0_65], %66 {strides = array<i32>} : memref<1x32x128xf32, #tpu.memory_space<vmem>>, vector<1x16x128xf32>,
    %c0_66 = arith.constant 0 : index
    %c9 = arith.constant 9 : index
    %c0_67 = arith.constant 0 : index
    %68 = vector.load %arg8[%c0_66, %c9, %c0_67] : memref<1x32x128xf32, #tpu.memory_space<vmem>>, vector<1x16x128xf32>
    %c0_68 = arith.constant 0 : index
    %c8_69 = arith.constant 8 : index
    %c0_70 = arith.constant 0 : index
    %69 = vector.load %arg8[%c0_68, %c8_69, %c0_70] : memref<1x32x128xf32, #tpu.memory_space<vmem>>, vector<1x16x128xf32>
    %c0_71 = arith.constant 0 : index
    %c7 = arith.constant 7 : index
    %c0_72 = arith.constant 0 : index
    %70 = vector.load %arg8[%c0_71, %c7, %c0_72] : memref<1x32x128xf32, #tpu.memory_space<vmem>>, vector<1x16x128xf32>
    %71 = tpu.concatenate %68, %69, %70 in 2 : vector<1x16x128xf32>, vector<1x16x128xf32>, vector<1x16x128xf32> -> vector<1x16x384xf32>
    %72 = vector.shape_cast %71 : vector<1x16x384xf32> to vector<16x384xf32>
    %c3 = arith.constant 3 : index
    %c0_73 = arith.constant 0 : index
    %c0_74 = arith.constant 0 : index
    %73 = vector.load %arg4[%c3, %c0_73, %c0_74] : memref<4x384x128xf32, #tpu.memory_space<vmem>>, vector<1x384x128xf32>
    %74 = vector.shape_cast %73 : vector<1x384x128xf32> to vector<384x128xf32>
    %cst_75 = arith.constant dense<0.000000e+00> : vector<16x128xf32>
    %75 = tpu.matmul %72, %74, %cst_75 {dimension_numbers = #tpu.dot_dimension_numbers<[1], [0], [0], [1], [0, 0, 1, 1], [], []>} : vector<16x384xf32>, vector<384x128xf32>, vector<16x128xf32> -> vector<16x128xf32>
    %76 = vector.shape_cast %75 : vector<16x128xf32> to vector<1x16x128xf32>
    %c3_76 = arith.constant 3 : index
    %c0_77 = arith.constant 0 : index
    %77 = vector.load %arg5[%c3_76, %c0_77] : memref<4x128xf32, #tpu.memory_space<vmem>>, vector<1x128xf32>
    %78 = vector.shape_cast %77 : vector<1x128xf32> to vector<1x1x128xf32>
    %79 = vector.broadcast %78 : vector<1x1x128xf32> to vector<1x16x128xf32>
    %80 = arith.addf %76, %79 : vector<1x16x128xf32>
    %c3_78 = arith.constant 3 : index
    %81 = memref.load %arg1[%c3_78] : memref<4xf32, #tpu.memory_space<smem>>
    %cst_79 = arith.constant 0.000000e+00 : f32
    %82 = vector.broadcast %cst_79 : f32 to vector<1x16x128xf32>
    %83 = arith.cmpf ogt, %80, %82 : vector<1x16x128xf32>
    %84 = vector.broadcast %81 : f32 to vector<1x16x128xf32>
    %85 = arith.mulf %84, %80 : vector<1x16x128xf32>
    %86 = arith.select %83, %80, %85 : vector<1x16x128xi1>, vector<1x16x128xf32>
    %c0_80 = arith.constant 0 : index
    %c8_81 = arith.constant 8 : index
    %c0_82 = arith.constant 0 : index
    %87 = vector.load %arg8[%c0_80, %c8_81, %c0_82] : memref<1x32x128xf32, #tpu.memory_space<vmem>>, vector<1x16x128xf32>
    tpu.vector_store %arg8[%c0_80, %c8_81, %c0_82], %86 {strides = array<i32>} : memref<1x32x128xf32, #tpu.memory_space<vmem>>, vector<1x16x128xf32>,
    %c0_83 = arith.constant 0 : index
    %c8_84 = arith.constant 8 : index
    %c0_85 = arith.constant 0 : index
    %88 = vector.load %arg8[%c0_83, %c8_84, %c0_85] : memref<1x32x128xf32, #tpu.memory_space<vmem>>, vector<1x16x128xf32>
    %89 = vector.shape_cast %88 : vector<1x16x128xf32> to vector<16x128xf32>
    %c0_86 = arith.constant 0 : index
    %c0_87 = arith.constant 0 : index
    %90 = vector.load %arg6[%c0_86, %c0_87] : memref<128x16xf32, #tpu.memory_space<vmem>>, vector<128x16xf32>
    %cst_88 = arith.constant dense<0.000000e+00> : vector<16x16xf32>
    %91 = tpu.matmul %89, %90, %cst_88 {dimension_numbers = #tpu.dot_dimension_numbers<[1], [0], [0], [1], [0, 0, 1, 1], [], []>} : vector<16x128xf32>, vector<128x16xf32>, vector<16x16xf32> -> vector<16x16xf32>
    %92 = vector.shape_cast %91 : vector<16x16xf32> to vector<1x16x16xf32>
    %cst_89 = arith.constant 0.000000e+00 : f32
    %93 = vector.broadcast %cst_89 : f32 to vector<1x17x8xf32>
    %c0_90 = arith.constant 0 : index
    %94 = memref.load %arg2[%c0_90] : memref<1xf32, #tpu.memory_space<smem>>
    %95 = vector.broadcast %94 : f32 to vector<1x17x8xf32>
    %96 = arith.addf %93, %95 : vector<1x17x8xf32>
    %c0_91 = arith.constant 0 : index
    %c0_92 = arith.constant 0 : index
    %c0_93 = arith.constant 0 : index
    %97 = vector.load %arg7[%c0_91, %c0_92, %c0_93] : memref<1x17x8xf32, #tpu.memory_space<vmem>>, vector<1x17x8xf32>
    tpu.vector_store %arg7[%c0_91, %c0_92, %c0_93], %96 {strides = array<i32>} : memref<1x17x8xf32, #tpu.memory_space<vmem>>, vector<1x17x8xf32>,
    %c0_94 = arith.constant 0 : index
    %c0_95 = arith.constant 0 : index
    %c0_96 = arith.constant 0 : index
    %98 = vector.load %arg7[%c0_94, %c0_95, %c0_96] : memref<1x17x8xf32, #tpu.memory_space<vmem>>, vector<1x16x8xf32>
    %99 = vector.extract_strided_slice %92 {offsets = [0, 0, 0], sizes = [1, 16, 8], strides = [1, 1, 1]} : vector<1x16x16xf32> to vector<1x16x8xf32>
    %100 = arith.addf %98, %99 : vector<1x16x8xf32>
    %c0_97 = arith.constant 0 : index
    %c0_98 = arith.constant 0 : index
    %c0_99 = arith.constant 0 : index
    %101 = vector.load %arg7[%c0_97, %c0_98, %c0_99] : memref<1x17x8xf32, #tpu.memory_space<vmem>>, vector<1x16x8xf32>
    tpu.vector_store %arg7[%c0_97, %c0_98, %c0_99], %100 {strides = array<i32>} : memref<1x17x8xf32, #tpu.memory_space<vmem>>, vector<1x16x8xf32>,
    %c0_100 = arith.constant 0 : index
    %c1_101 = arith.constant 1 : index
    %c0_102 = arith.constant 0 : index
    %102 = vector.load %arg7[%c0_100, %c1_101, %c0_102] : memref<1x17x8xf32, #tpu.memory_space<vmem>>, vector<1x16x8xf32>
    %103 = vector.extract_strided_slice %92 {offsets = [0, 0, 8], sizes = [1, 16, 8], strides = [1, 1, 1]} : vector<1x16x16xf32> to vector<1x16x8xf32>
    %104 = arith.addf %102, %103 : vector<1x16x8xf32>
    %c0_103 = arith.constant 0 : index
    %c1_104 = arith.constant 1 : index
    %c0_105 = arith.constant 0 : index
    %105 = vector.load %arg7[%c0_103, %c1_104, %c0_105] : memref<1x17x8xf32, #tpu.memory_space<vmem>>, vector<1x16x8xf32>
    tpu.vector_store %arg7[%c0_103, %c1_104, %c0_105], %104 {strides = array<i32>} : memref<1x17x8xf32, #tpu.memory_space<vmem>>, vector<1x16x8xf32>,
    return
  }
  func.func @transform_0(%arg0: i32) -> i32 {
    %c0_i32 = arith.constant 0 : i32
    %c0_i32_0 = arith.constant 0 : i32
    return %c0_i32 : i32
  }
  func.func @transform_1(%arg0: i32) -> i32 {
    %c0_i32 = arith.constant 0 : i32
    %c0_i32_0 = arith.constant 0 : i32
    return %c0_i32 : i32
  }
  func.func @transform_2(%arg0: i32) -> (i32, i32, i32) {
    %c0_i32 = arith.constant 0 : i32
    %c0_i32_0 = arith.constant 0 : i32
    %c0_i32_1 = arith.constant 0 : i32
    return %arg0, %c0_i32, %c0_i32_0 : i32, i32, i32
  }
  func.func @transform_3(%arg0: i32) -> (i32, i32, i32) {
    %c0_i32 = arith.constant 0 : i32
    %c0_i32_0 = arith.constant 0 : i32
    %c0_i32_1 = arith.constant 0 : i32
    %c0_i32_2 = arith.constant 0 : i32
    return %c0_i32, %c0_i32_0, %c0_i32_1 : i32, i32, i32
  }
  func.func @transform_4(%arg0: i32) -> (i32, i32) {
    %c0_i32 = arith.constant 0 : i32
    %c0_i32_0 = arith.constant 0 : i32
    %c0_i32_1 = arith.constant 0 : i32
    return %c0_i32, %c0_i32_0 : i32, i32
  }
  func.func @transform_5(%arg0: i32) -> (i32, i32) {
    %c0_i32 = arith.constant 0 : i32
    %c0_i32_0 = arith.constant 0 : i32
    %c0_i32_1 = arith.constant 0 : i32
    return %c0_i32, %c0_i32_0 : i32, i32
  }
  func.func @transform_6(%arg0: i32) -> (i32, i32, i32) {
    %c0_i32 = arith.constant 0 : i32
    %c0_i32_0 = arith.constant 0 : i32
    %c0_i32_1 = arith.constant 0 : i32
    return %arg0, %c0_i32, %c0_i32_0 : i32, i32, i32
  }
}

</mosaic_0001>

<llo_original>
// kernel: decoder_forward.1
$region0: #{decoder_forward.1}
  #allocation0 [shape = 'u32[]', space=smem, size = 0x4, offset = 0x4, fixed_abs, tag = 'smem constant byte address 0x4 - core index']
  #allocation1 [shape = 'u32[72,128]{1,0:T(1,128)}', space=vmem, size = 0x9000, scoped, tag = 'internal scratch']
  #allocation2 [shape = 'f32[1,32,128]{2,1,0:T(8,128)}', space=vmem, size = 0x4000, scoped, tag = 'scratch operand']
  #allocation3 [shape = 'f32[1]{0:T(128)S(6)}', space=smem, size = 0x200, scoped, tag = 'scoped memory for decoder_forward.1']
  %s0 = inlined_call_operand.vmem [shape: f32[4], index: 0, kind: input, shape index: {}]
  %s1 = inlined_call_operand.<no memory space> [shape: f32[1], index: 1, kind: input, shape index: {}]
  %s2 = inlined_call_operand.vmem [shape: f32[2,16,32], index: 2, kind: input, shape index: {}]
  %s3 = inlined_call_operand.vmem [shape: f32[4,384,128], index: 3, kind: input, shape index: {}]
  %s4 = inlined_call_operand.vmem [shape: f32[4,128], index: 4, kind: input, shape index: {}]
  %s5 = inlined_call_operand.vmem [shape: f32[128,16], index: 5, kind: input, shape index: {}]
  %s6 = inlined_call_operand.vmem [shape: f32[2,17,8], index: 6, kind: output, shape index: {}]
  %s7 = sld [smem:[#allocation0]]
  $region61: #{decoder_forward.1} parent=0
    _
  %s9 = ssub.s32 1, %s7
  %s10 = scalar_select 0, %s9, %s7
  %11 = sst [smem:[#allocation3]] %s1
  $region1: #{decoder_forward.1} parent=0
    #allocation4 [shape = 'u8[512]{0}', space=smem, size = 0x200, scoped, tag = 'input window, operand 0, single buffered']
    #allocation5 [shape = 's32[2]{0}', space=sflag, size = 0x8, scoped, tag = 'scoped memory for decoder_forward.1']
    %12 = vsyncpa [#allocation5], 0
    loop: start=0, step=1, limit=4
    $region2: #{decoder_forward.1} parent=1 // loop_pre_header
      _
    $region3: #{decoder_forward.1} parent=1 // loop_header
      %s14 = sphi 0, %s18
      %p15 = scmp.ge.s32.totalorder %s14, 4
      %s22 = sphi 0, %s22
      %s24 = sphi 0, %s22
      %s25 = sphi 0, %s24
      %s39 = sphi 0, %s25
      %s43 = sphi 0, %s43
      %s45 = sphi 0, %s43
      %s46 = sphi 0, %s45
      %s60 = sphi 0, %s46
      %s66 = sphi 0, %s68
      %s69 = sphi 0, %s66
      %s70 = sphi 0, %s69
      %s86 = sphi 0, %s70
      %s90 = sphi 0, %s90
      %s92 = sphi 0, %s90
      %s93 = sphi 0, %s92
      %s107 = sphi 0, %s93
      %s111 = sphi 0, %s111
      %s113 = sphi 0, %s111
      %s114 = sphi 0, %s113
      %s128 = sphi 0, %s114
      %s132 = sphi 0, %s132
      %s134 = sphi 0, %s132
      %s135 = sphi 0, %s134
      %s149 = sphi 0, %s135
      %s155 = sphi 0, %s157
      %s158 = sphi 0, %s155
      %s159 = sphi 0, %s158
      %s175 = sphi 0, %s159
    $region4: #{decoder_forward.1} parent=1 // loop_header_branch
      %17 = sbr.rel (%p15) target = $region8
    $region5: #{decoder_forward.1} parent=1 // loop_body
      %s19 = ssub.s32 %s14, 1
      %s20 = ssub.s32 %s14, 2
      %s21 = sadd.s32 %s14, 1
      %s23 = sadd.s32 %s22, 1
      %p26 = scmp.eq.s32.totalorder %s14, 1
      %p27 = scmp.ne.s32.totalorder %s22, %s24
      %p28 = scmp.eq.s32.totalorder %s14, 0
      %p29 = por %p27, %p28
      %p30 = scmp.ne.s32.totalorder %s22, %s24
      %p31 = scmp.eq.s32.totalorder %s19, 1
      %p32 = por %p30, %p31
      %p33 = scmp.ne.s32.totalorder %s24, %s25
      %p34 = scmp.eq.s32.totalorder %s19, 0
      %p35 = por %p33, %p34
      %p36 = scmp.ne.s32.totalorder %s24, %s25
      %p37 = scmp.eq.s32.totalorder %s20, 1
      %p38 = por %p36, %p37
      %p40 = scmp.ne.s32.totalorder %s25, %s39
      %p41 = scmp.eq.s32.totalorder %s20, 0
      %p42 = por %p40, %p41
      %s44 = sadd.s32 %s43, 1
      %p47 = scmp.eq.s32.totalorder %s14, 1
      %p48 = scmp.ne.s32.totalorder %s43, %s45
      %p49 = scmp.eq.s32.totalorder %s14, 0
      %p50 = por %p48, %p49
      %p51 = scmp.ne.s32.totalorder %s43, %s45
      %p52 = scmp.eq.s32.totalorder %s19, 1
      %p53 = por %p51, %p52
      %p54 = scmp.ne.s32.totalorder %s45, %s46
      %p55 = scmp.eq.s32.totalorder %s19, 0
      %p56 = por %p54, %p55
      %p57 = scmp.ne.s32.totalorder %s45, %s46
      %p58 = scmp.eq.s32.totalorder %s20, 1
      %p59 = por %p57, %p58
      %p61 = scmp.ne.s32.totalorder %s46, %s60
      %p62 = scmp.eq.s32.totalorder %s20, 0
      %p63 = por %p61, %p62
      %s64 = ssub.s32 %s14, %s21
      %p65 = scmp.eq.s32.totalorder %s64, 0
      %s67 = sadd.s32 %s66, 1
      %s68 = scalar_select %p65, %s66, %s67
      %p71 = pneg %p65
      %p72 = scmp.eq.s32.totalorder %s14, 1
      %p73 = por %p71, %p72
      %p74 = scmp.ne.s32.totalorder %s66, %s69
      %p75 = scmp.eq.s32.totalorder %s14, 0
      %p76 = por %p74, %p75
      %p77 = scmp.ne.s32.totalorder %s66, %s69
      %p78 = scmp.eq.s32.totalorder %s19, 1
      %p79 = por %p77, %p78
      %p80 = scmp.ne.s32.totalorder %s69, %s70
      %p81 = scmp.eq.s32.totalorder %s19, 0
      %p82 = por %p80, %p81
      %p83 = scmp.ne.s32.totalorder %s69, %s70
      %p84 = scmp.eq.s32.totalorder %s20, 1
      %p85 = por %p83, %p84
      %p87 = scmp.ne.s32.totalorder %s70, %s86
      %p88 = scmp.eq.s32.totalorder %s20, 0
      %p89 = por %p87, %p88
      %s91 = sadd.s32 %s90, 1
      %p94 = scmp.eq.s32.totalorder %s14, 1
      %p95 = scmp.ne.s32.totalorder %s90, %s92
      %p96 = scmp.eq.s32.totalorder %s14, 0
      %p97 = por %p95, %p96
      %p98 = scmp.ne.s32.totalorder %s90, %s92
      %p99 = scmp.eq.s32.totalorder %s19, 1
      %p100 = por %p98, %p99
      %p101 = scmp.ne.s32.totalorder %s92, %s93
      %p102 = scmp.eq.s32.totalorder %s19, 0
      %p103 = por %p101, %p102
      %p104 = scmp.ne.s32.totalorder %s92, %s93
      %p105 = scmp.eq.s32.totalorder %s20, 1
      %p106 = por %p104, %p105
      %p108 = scmp.ne.s32.totalorder %s93, %s107
      %p109 = scmp.eq.s32.totalorder %s20, 0
      %p110 = por %p108, %p109
      %s112 = sadd.s32 %s111, 1
      %p115 = scmp.eq.s32.totalorder %s14, 1
      %p116 = scmp.ne.s32.totalorder %s111, %s113
      %p117 = scmp.eq.s32.totalorder %s14, 0
      %p118 = por %p116, %p117
      %p119 = scmp.ne.s32.totalorder %s111, %s113
      %p120 = scmp.eq.s32.totalorder %s19, 1
      %p121 = por %p119, %p120
      %p122 = scmp.ne.s32.totalorder %s113, %s114
      %p123 = scmp.eq.s32.totalorder %s19, 0
      %p124 = por %p122, %p123
      %p125 = scmp.ne.s32.totalorder %s113, %s114
      %p126 = scmp.eq.s32.totalorder %s20, 1
      %p127 = por %p125, %p126
      %p129 = scmp.ne.s32.totalorder %s114, %s128
      %p130 = scmp.eq.s32.totalorder %s20, 0
      %p131 = por %p129, %p130
      %s133 = sadd.s32 %s132, 1
      %p136 = scmp.eq.s32.totalorder %s14, 1
      %p137 = scmp.ne.s32.totalorder %s132, %s134
      %p138 = scmp.eq.s32.totalorder %s14, 0
      %p139 = por %p137, %p138
      %p140 = scmp.ne.s32.totalorder %s132, %s134
      %p141 = scmp.eq.s32.totalorder %s19, 1
      %p142 = por %p140, %p141
      %p143 = scmp.ne.s32.totalorder %s134, %s135
      %p144 = scmp.eq.s32.totalorder %s19, 0
      %p145 = por %p143, %p144
      %p146 = scmp.ne.s32.totalorder %s134, %s135
      %p147 = scmp.eq.s32.totalorder %s20, 1
      %p148 = por %p146, %p147
      %p150 = scmp.ne.s32.totalorder %s135, %s149
      %p151 = scmp.eq.s32.totalorder %s20, 0
      %p152 = por %p150, %p151
      %s153 = ssub.s32 %s14, %s21
      %p154 = scmp.eq.s32.totalorder %s153, 0
      %s156 = sadd.s32 %s155, 1
      %s157 = scalar_select %p154, %s155, %s156
      %p160 = pneg %p154
      %p161 = scmp.eq.s32.totalorder %s14, 1
      %p162 = por %p160, %p161
      %p163 = scmp.ne.s32.totalorder %s155, %s158
      %p164 = scmp.eq.s32.totalorder %s14, 0
      %p165 = por %p163, %p164
      %p166 = scmp.ne.s32.totalorder %s155, %s158
      %p167 = scmp.eq.s32.totalorder %s19, 1
      %p168 = por %p166, %p167
      %p169 = scmp.ne.s32.totalorder %s158, %s159
      %p170 = scmp.eq.s32.totalorder %s19, 0
      %p171 = por %p169, %p170
      %p172 = scmp.ne.s32.totalorder %s158, %s159
      %p173 = scmp.eq.s32.totalorder %s20, 1
      %p174 = por %p172, %p173
      %p176 = scmp.ne.s32.totalorder %s159, %s175
      %p177 = scmp.eq.s32.totalorder %s20, 0
      %p178 = por %p176, %p177
      %p179 = scmp.le.s32.totalorder 1, %s14
      %p180 = scmp.lt.s32.totalorder %s14, 3
      %p181 = pnand %p179, %p180
      %p182 = pneg %p181
      // Predicated region
      $region9: #{decoder_forward.1} parent=5 // pred_check
        _
      $region10: #{decoder_forward.1} parent=5 // pred_check_branch
        %184 = sbr.rel (%p181) target = $region12
      $region11: #{decoder_forward.1} parent=5 // pred_region
        %s185 = ssub.s32 %s14, 1
        // Predicated region
        $region13: #{decoder_forward.1} parent=11 // pred_check
          %p186 = pneg %p35
        $region14: #{decoder_forward.1} parent=11 // pred_check_branch
          %188 = sbr.rel (%p186) target = $region16
        $region15: #{decoder_forward.1} parent=11 // pred_region
          %190 = vsyncadd [#allocation5], 0
          %s192 = sshll.u32 %s0, 4
          %s193 = int_to_ptr.vmem [resolvable:$true] %s192
          %195 = dma.vmem_to_smem %s193, 16, [#allocation4], [#allocation5]
        $region16: #{decoder_forward.1} parent=11 // pred_fallthru
          _
        // Predicated region
        $region17: #{decoder_forward.1} parent=11 // pred_check
          %p196 = pneg %p56
        $region18: #{decoder_forward.1} parent=11 // pred_check_branch
          %198 = sbr.rel (%p196) target = $region20
        $region19: #{decoder_forward.1} parent=11 // pred_region
          _
        $region20: #{decoder_forward.1} parent=11 // pred_fallthru
          _
        // Predicated region
        $region21: #{decoder_forward.1} parent=11 // pred_check
          %p199 = pneg %p103
        $region22: #{decoder_forward.1} parent=11 // pred_check_branch
          %201 = sbr.rel (%p199) target = $region24
        $region23: #{decoder_forward.1} parent=11 // pred_region
          _
        $region24: #{decoder_forward.1} parent=11 // pred_fallthru
          _
        // Predicated region
        $region25: #{decoder_forward.1} parent=11 // pred_check
          %p202 = pneg %p124
        $region26: #{decoder_forward.1} parent=11 // pred_check_branch
          %204 = sbr.rel (%p202) target = $region28
        $region27: #{decoder_forward.1} parent=11 // pred_region
          _
        $region28: #{decoder_forward.1} parent=11 // pred_fallthru
          _
        // Predicated region
        $region29: #{decoder_forward.1} parent=11 // pred_check
          %p205 = pneg %p145
        $region30: #{decoder_forward.1} parent=11 // pred_check_branch
          %207 = sbr.rel (%p205) target = $region32
        $region31: #{decoder_forward.1} parent=11 // pred_region
          _
        $region32: #{decoder_forward.1} parent=11 // pred_fallthru
          _
      $region12: #{decoder_forward.1} parent=5 // pred_fallthru
        _
      %p208 = scmp.lt.s32.totalorder %s14, 2
      // Predicated region
      $region33: #{decoder_forward.1} parent=5 // pred_check
        %p209 = pneg %p208
      $region34: #{decoder_forward.1} parent=5 // pred_check_branch
        %211 = sbr.rel (%p209) target = $region36
      $region35: #{decoder_forward.1} parent=5 // pred_region
        // Predicated region
        $region37: #{decoder_forward.1} parent=35 // pred_check
          %p212 = pneg %p76
        $region38: #{decoder_forward.1} parent=35 // pred_check_branch
          %214 = sbr.rel (%p212) target = $region40
        $region39: #{decoder_forward.1} parent=35 // pred_region
          %p215 = scmp.lt.s32.totalorder %s14, 1
          %s216 = scalar_select %p215, %s14, 1
          %s217 = smul.addr %s216, 2
          %s218 = smul.addr %s217, 8
          %s219 = scalar_lea.vmem %s2, %s218
        $region40: #{decoder_forward.1} parent=35 // pred_fallthru
          _
      $region36: #{decoder_forward.1} parent=5 // pred_fallthru
        _
      %p220 = scmp.le.s32.totalorder 1, %s14
      %p221 = scmp.lt.s32.totalorder %s14, 3
      %p222 = pnand %p220, %p221
      %p223 = pneg %p222
      // Predicated region
      $region41: #{decoder_forward.1} parent=5 // pred_check
        _
      $region42: #{decoder_forward.1} parent=5 // pred_check_branch
        %225 = sbr.rel (%p222) target = $region44
      $region43: #{decoder_forward.1} parent=5 // pred_region
        %s226 = ssub.s32 %s14, 1
        // Predicated region
        $region45: #{decoder_forward.1} parent=43 // pred_check
          %p227 = pneg %p35
        $region46: #{decoder_forward.1} parent=43 // pred_check_branch
          %229 = sbr.rel (%p227) target = $region48
        $region47: #{decoder_forward.1} parent=43 // pred_region
          %231 = dma.done [#allocation5], 16
        $region48: #{decoder_forward.1} parent=43 // pred_fallthru
          _
        %232 = sfence
        %p233 = pneg %p35
        %p234 = pneg %p32
        %p235 = pneg %p56
        %p236 = pneg %p53
        %p237 = scmp.lt.s32.totalorder %s19, 1
        %s238 = scalar_select %p237, %s19, 1
        %s239 = smul.addr %s238, 2
        %s240 = smul.addr %s239, 8
        %s241 = scalar_lea.vmem %s2, %s240
        %p242 = pneg %p82
        %p243 = pneg %p79
        %p244 = pneg %p103
        %p245 = pneg %p100
        %p246 = pneg %p124
        %p247 = pneg %p121
        %p248 = pneg %p145
        %p249 = pneg %p142
        %p250 = pneg %p171
        %p251 = pneg %p168
        %p252 = scmp.lt.s32.totalorder %s19, 1
        %s253 = scalar_select %p252, %s19, 1
        %s254 = smul.addr %s253, 3
        %s255 = smul.addr %s254, 8
        %s256 = scalar_lea.vmem %s6, %s255
        %p257 = scmp.lt.s32.totalorder %s19, 1
        %s258 = scalar_select %p257, %s19, 1
        %s259 = smul.addr %s258, 2
        %s260 = smul.addr %s259, 8
        %s261 = scalar_lea.vmem %s2, %s260
        %p262 = scmp.lt.s32.totalorder %s19, 1
        %s263 = scalar_select %p262, %s19, 1
        %s264 = smul.addr %s263, 3
        %s265 = smul.addr %s264, 8
        %s266 = scalar_lea.vmem %s6, %s265
        %267 = vst [vmem:[#allocation2] sm:$0xff] 0.0
        %268 = vst [vmem:[#allocation2 + $0x18] sm:$0xff] 0.0
        %v269 = vld [vmem:[%s261] sm:$0xff]
        %v270 = vld [vmem:[%s261 + $0x8] sm:$0xff]
        %vm271 = vcmask 261120
        %272 = vst.msk [vmem:[#allocation2 + $0x8] sm:$0xff] %vm271, %v269
        %273 = vst.msk [vmem:[#allocation2 + $0x10] sm:$0xff] %vm271, %v270
        %vm274 = vcmask 1047808
        %275 = vst.msk [vmem:[#allocation2 + $0x8] sm:$0xff] %vm274, 0.0
        %276 = vst.msk [vmem:[#allocation2 + $0x10] sm:$0xff] %vm274, 0.0
        %v277 = vld [vmem:[#allocation2 + $0x10] sm:$0xff]
        %v278 = vld [vmem:[#allocation2 + $0x18] sm:$0xff]
        %v279 = vld [vmem:[#allocation2 + $0x8] sm:$0xff]
        %v280 = vld [vmem:[#allocation2 + $0x10] sm:$0xff]
        %v281 = vld [vmem:[#allocation2] sm:$0xff]
        %v282 = vld [vmem:[%s3] sm:$0xff]
        %v283 = vld [vmem:[%s3 + $0x8] sm:$0xff]
        %v284 = vld [vmem:[%s3 + $0x10] sm:$0xff]
        %v285 = vld [vmem:[%s3 + $0x18] sm:$0xff]
        %v286 = vld [vmem:[%s3 + $0x20] sm:$0xff]
        %v287 = vld [vmem:[%s3 + $0x28] sm:$0xff]
        %v288 = vld [vmem:[%s3 + $0x30] sm:$0xff]
        %v289 = vld [vmem:[%s3 + $0x38] sm:$0xff]
        %v290 = vld [vmem:[%s3 + $0x40] sm:$0xff]
        %v291 = vld [vmem:[%s3 + $0x48] sm:$0xff]
        %v292 = vld [vmem:[%s3 + $0x50] sm:$0xff]
        %v293 = vld [vmem:[%s3 + $0x58] sm:$0xff]
        %v294 = vld [vmem:[%s3 + $0x60] sm:$0xff]
        %v295 = vld [vmem:[%s3 + $0x68] sm:$0xff]
        %v296 = vld [vmem:[%s3 + $0x70] sm:$0xff]
        %v297 = vld [vmem:[%s3 + $0x78] sm:$0xff]
        %v298 = vld [vmem:[%s3 + $0x80] sm:$0xff]
        %v299 = vld [vmem:[%s3 + $0x88] sm:$0xff]
        %v300 = vld [vmem:[%s3 + $0x90] sm:$0xff]
        %v301 = vld [vmem:[%s3 + $0x98] sm:$0xff]
        %v302 = vld [vmem:[%s3 + $0xa0] sm:$0xff]
        %v303 = vld [vmem:[%s3 + $0xa8] sm:$0xff]
        %v304 = vld [vmem:[%s3 + $0xb0] sm:$0xff]
        %v305 = vld [vmem:[%s3 + $0xb8] sm:$0xff]
        %v306 = vld [vmem:[%s3 + $0xc0] sm:$0xff]
        %v307 = vld [vmem:[%s3 + $0xc8] sm:$0xff]
        %v308 = vld [vmem:[%s3 + $0xd0] sm:$0xff]
        %v309 = vld [vmem:[%s3 + $0xd8] sm:$0xff]
        %v310 = vld [vmem:[%s3 + $0xe0] sm:$0xff]
        %v311 = vld [vmem:[%s3 + $0xe8] sm:$0xff]
        %v312 = vld [vmem:[%s3 + $0xf0] sm:$0xff]
        %v313 = vld [vmem:[%s3 + $0xf8] sm:$0xff]
        %v314 = vld [vmem:[%s3 + $0x100] sm:$0xff]
        %v315 = vld [vmem:[%s3 + $0x108] sm:$0xff]
        %v316 = vld [vmem:[%s3 + $0x110] sm:$0xff]
        %v317 = vld [vmem:[%s3 + $0x118] sm:$0xff]
        %v318 = vld [vmem:[%s3 + $0x120] sm:$0xff]
        %v319 = vld [vmem:[%s3 + $0x128] sm:$0xff]
        %v320 = vld [vmem:[%s3 + $0x130] sm:$0xff]
        %v321 = vld [vmem:[%s3 + $0x138] sm:$0xff]
        %v322 = vld [vmem:[%s3 + $0x140] sm:$0xff]
        %v323 = vld [vmem:[%s3 + $0x148] sm:$0xff]
        %v324 = vld [vmem:[%s3 + $0x150] sm:$0xff]
        %v325 = vld [vmem:[%s3 + $0x158] sm:$0xff]
        %v326 = vld [vmem:[%s3 + $0x160] sm:$0xff]
        %v327 = vld [vmem:[%s3 + $0x168] sm:$0xff]
        %v328 = vld [vmem:[%s3 + $0x170] sm:$0xff]
        %v329 = vld [vmem:[%s3 + $0x178] sm:$0xff]
        %330 = vmatpush.msra.mxu0 %v297
        %331 = vmatpush.msra.mxu0 %v296
        %332 = vmatpush.msra.mxu0 %v295
        %333 = vmatpush.msra.mxu0 %v294
        %334 = vmatpush.msra.mxu0 %v293
        %335 = vmatpush.msra.mxu0 %v292
        %336 = vmatpush.msra.mxu0 %v291
        %337 = vmatpush.msra.mxu0 %v290
        %338 = vmatpush.msra.mxu0 %v289
        %339 = vmatpush.msra.mxu0 %v288
        %340 = vmatpush.msra.mxu0 %v287
        %341 = vmatpush.msra.mxu0 %v286
        %342 = vmatpush.msra.mxu0 %v285
        %343 = vmatpush.msra.mxu0 %v284
        %344 = vmatpush.msra.mxu0 %v283
        %345 = vmatpush.msra.mxu0 %v282
        %346 = vmatmul.f32.gmra.mxu0 %v277
        %v347 = vpop.f32.mrf.mxu0
        %v348 = vadd.f32 0.0, %v347
        %349 = vmatmul.f32.gmra.mxu0 %v278
        %v350 = vpop.f32.mrf.mxu0
        %v351 = vadd.f32 0.0, %v350
        %352 = vdwg.mxu0
        %353 = vmatpush.msra.mxu0 %v313
        %354 = vmatpush.msra.mxu0 %v312
        %355 = vmatpush.msra.mxu0 %v311
        %356 = vmatpush.msra.mxu0 %v310
        %357 = vmatpush.msra.mxu0 %v309
        %358 = vmatpush.msra.mxu0 %v308
        %359 = vmatpush.msra.mxu0 %v307
        %360 = vmatpush.msra.mxu0 %v306
        %361 = vmatpush.msra.mxu0 %v305
        %362 = vmatpush.msra.mxu0 %v304
        %363 = vmatpush.msra.mxu0 %v303
        %364 = vmatpush.msra.mxu0 %v302
        %365 = vmatpush.msra.mxu0 %v301
        %366 = vmatpush.msra.mxu0 %v300
        %367 = vmatpush.msra.mxu0 %v299
        %368 = vmatpush.msra.mxu0 %v298
        %369 = vmatmul.f32.gmra.mxu0 %v279
        %v370 = vpop.f32.mrf.mxu0
        %v371 = vadd.f32 %v348, %v370
        %372 = vmatmul.f32.gmra.mxu0 %v280
        %v373 = vpop.f32.mrf.mxu0
        %v374 = vadd.f32 %v351, %v373
        %375 = vdwg.mxu0
        %376 = vmatpush.msra.mxu0 %v329
        %377 = vmatpush.msra.mxu0 %v328
        %378 = vmatpush.msra.mxu0 %v327
        %379 = vmatpush.msra.mxu0 %v326
        %380 = vmatpush.msra.mxu0 %v325
        %381 = vmatpush.msra.mxu0 %v324
        %382 = vmatpush.msra.mxu0 %v323
        %383 = vmatpush.msra.mxu0 %v322
        %384 = vmatpush.msra.mxu0 %v321
        %385 = vmatpush.msra.mxu0 %v320
        %386 = vmatpush.msra.mxu0 %v319
        %387 = vmatpush.msra.mxu0 %v318
        %388 = vmatpush.msra.mxu0 %v317
        %389 = vmatpush.msra.mxu0 %v316
        %390 = vmatpush.msra.mxu0 %v315
        %391 = vmatpush.msra.mxu0 %v314
        %392 = vmatmul.f32.gmra.mxu0 %v281
        %v393 = vpop.f32.mrf.mxu0
        %v394 = vadd.f32 %v371, %v393
        %395 = vmatmul.f32.gmra.mxu0 %v279
        %v396 = vpop.f32.mrf.mxu0
        %v397 = vadd.f32 %v374, %v396
        %398 = vdwg.mxu0
        %v399 = vld [vmem:[%s4] sm:$0x1]
        %v400 = vperm.slane %v399, 0
        %v401 = vadd.f32 %v394, %v400
        %v402 = vadd.f32 %v397, %v400
        %s403 = sld [smem:[#allocation4]]
        %vm404 = vcmp.gt.f32.partialorder %v401, 0.0
        %vm405 = vcmp.gt.f32.partialorder %v402, 0.0
        %v406 = vstv %s403
        %v407 = vmul.f32 %v406, %v401
        %v408 = vmul.f32 %v406, %v402
        %v409 = vsel %vm404, %v401, %v407
        %v410 = vsel %vm405, %v402, %v408
        %411 = vst [vmem:[#allocation2 + $0x8] sm:$0xff] %v409
        %412 = vst [vmem:[#allocation2 + $0x10] sm:$0xff] %v410
        %v413 = vld [vmem:[#allocation2 + $0xc] sm:$0xff]
        %v414 = vld [vmem:[#allocation2 + $0x14] sm:$0xff]
        %v415 = vld [vmem:[#allocation2 + $0x8] sm:$0xff]
        %v416 = vld [vmem:[#allocation2 + $0x10] sm:$0xff]
        %v417 = vld [vmem:[#allocation2 + $0x4] sm:$0xff]
        %s418 = scalar_lea.vmem %s3, 384
        %v419 = vld [vmem:[%s418] sm:$0xff]
        %v420 = vld [vmem:[%s418 + $0x8] sm:$0xff]
        %v421 = vld [vmem:[%s418 + $0x10] sm:$0xff]
        %v422 = vld [vmem:[%s418 + $0x18] sm:$0xff]
        %v423 = vld [vmem:[%s418 + $0x20] sm:$0xff]
        %v424 = vld [vmem:[%s418 + $0x28] sm:$0xff]
        %v425 = vld [vmem:[%s418 + $0x30] sm:$0xff]
        %v426 = vld [vmem:[%s418 + $0x38] sm:$0xff]
        %v427 = vld [vmem:[%s418 + $0x40] sm:$0xff]
        %v428 = vld [vmem:[%s418 + $0x48] sm:$0xff]
        %v429 = vld [vmem:[%s418 + $0x50] sm:$0xff]
        %v430 = vld [vmem:[%s418 + $0x58] sm:$0xff]
        %v431 = vld [vmem:[%s418 + $0x60] sm:$0xff]
        %v432 = vld [vmem:[%s418 + $0x68] sm:$0xff]
        %v433 = vld [vmem:[%s418 + $0x70] sm:$0xff]
        %v434 = vld [vmem:[%s418 + $0x78] sm:$0xff]
        %v435 = vld [vmem:[%s418 + $0x80] sm:$0xff]
        %v436 = vld [vmem:[%s418 + $0x88] sm:$0xff]
        %v437 = vld [vmem:[%s418 + $0x90] sm:$0xff]
        %v438 = vld [vmem:[%s418 + $0x98] sm:$0xff]
        %v439 = vld [vmem:[%s418 + $0xa0] sm:$0xff]
        %v440 = vld [vmem:[%s418 + $0xa8] sm:$0xff]
        %v441 = vld [vmem:[%s418 + $0xb0] sm:$0xff]
        %v442 = vld [vmem:[%s418 + $0xb8] sm:$0xff]
        %v443 = vld [vmem:[%s418 + $0xc0] sm:$0xff]
        %v444 = vld [vmem:[%s418 + $0xc8] sm:$0xff]
        %v445 = vld [vmem:[%s418 + $0xd0] sm:$0xff]
        %v446 = vld [vmem:[%s418 + $0xd8] sm:$0xff]
        %v447 = vld [vmem:[%s418 + $0xe0] sm:$0xff]
        %v448 = vld [vmem:[%s418 + $0xe8] sm:$0xff]
        %v449 = vld [vmem:[%s418 + $0xf0] sm:$0xff]
        %v450 = vld [vmem:[%s418 + $0xf8] sm:$0xff]
        %v451 = vld [vmem:[%s418 + $0x100] sm:$0xff]
        %v452 = vld [vmem:[%s418 + $0x108] sm:$0xff]
        %v453 = vld [vmem:[%s418 + $0x110] sm:$0xff]
        %v454 = vld [vmem:[%s418 + $0x118] sm:$0xff]
        %v455 = vld [vmem:[%s418 + $0x120] sm:$0xff]
        %v456 = vld [vmem:[%s418 + $0x128] sm:$0xff]
        %v457 = vld [vmem:[%s418 + $0x130] sm:$0xff]
        %v458 = vld [vmem:[%s418 + $0x138] sm:$0xff]
        %v459 = vld [vmem:[%s418 + $0x140] sm:$0xff]
        %v460 = vld [vmem:[%s418 + $0x148] sm:$0xff]
        %v461 = vld [vmem:[%s418 + $0x150] sm:$0xff]
        %v462 = vld [vmem:[%s418 + $0x158] sm:$0xff]
        %v463 = vld [vmem:[%s418 + $0x160] sm:$0xff]
        %v464 = vld [vmem:[%s418 + $0x168] sm:$0xff]
        %v465 = vld [vmem:[%s418 + $0x170] sm:$0xff]
        %v466 = vld [vmem:[%s418 + $0x178] sm:$0xff]
        %467 = vmatpush.msra.mxu0 %v434
        %468 = vmatpush.msra.mxu0 %v433
        %469 = vmatpush.msra.mxu0 %v432
        %470 = vmatpush.msra.mxu0 %v431
        %471 = vmatpush.msra.mxu0 %v430
        %472 = vmatpush.msra.mxu0 %v429
        %473 = vmatpush.msra.mxu0 %v428
        %474 = vmatpush.msra.mxu0 %v427
        %475 = vmatpush.msra.mxu0 %v426
        %476 = vmatpush.msra.mxu0 %v425
        %477 = vmatpush.msra.mxu0 %v424
        %478 = vmatpush.msra.mxu0 %v423
        %479 = vmatpush.msra.mxu0 %v422
        %480 = vmatpush.msra.mxu0 %v421
        %481 = vmatpush.msra.mxu0 %v420
        %482 = vmatpush.msra.mxu0 %v419
        %483 = vmatmul.f32.gmra.mxu0 %v413
        %v484 = vpop.f32.mrf.mxu0
        %v485 = vadd.f32 0.0, %v484
        %486 = vmatmul.f32.gmra.mxu0 %v414
        %v487 = vpop.f32.mrf.mxu0
        %v488 = vadd.f32 0.0, %v487
        %489 = vdwg.mxu0
        %490 = vmatpush.msra.mxu0 %v450
        %491 = vmatpush.msra.mxu0 %v449
        %492 = vmatpush.msra.mxu0 %v448
        %493 = vmatpush.msra.mxu0 %v447
        %494 = vmatpush.msra.mxu0 %v446
        %495 = vmatpush.msra.mxu0 %v445
        %496 = vmatpush.msra.mxu0 %v444
        %497 = vmatpush.msra.mxu0 %v443
        %498 = vmatpush.msra.mxu0 %v442
        %499 = vmatpush.msra.mxu0 %v441
        %500 = vmatpush.msra.mxu0 %v440
        %501 = vmatpush.msra.mxu0 %v439
        %502 = vmatpush.msra.mxu0 %v438
        %503 = vmatpush.msra.mxu0 %v437
        %504 = vmatpush.msra.mxu0 %v436
        %505 = vmatpush.msra.mxu0 %v435
        %506 = vmatmul.f32.gmra.mxu0 %v415
        %v507 = vpop.f32.mrf.mxu0
        %v508 = vadd.f32 %v485, %v507
        %509 = vmatmul.f32.gmra.mxu0 %v416
        %v510 = vpop.f32.mrf.mxu0
        %v511 = vadd.f32 %v488, %v510
        %512 = vdwg.mxu0
        %513 = vmatpush.msra.mxu0 %v466
        %514 = vmatpush.msra.mxu0 %v465
        %515 = vmatpush.msra.mxu0 %v464
        %516 = vmatpush.msra.mxu0 %v463
        %517 = vmatpush.msra.mxu0 %v462
        %518 = vmatpush.msra.mxu0 %v461
        %519 = vmatpush.msra.mxu0 %v460
        %520 = vmatpush.msra.mxu0 %v459
        %521 = vmatpush.msra.mxu0 %v458
        %522 = vmatpush.msra.mxu0 %v457
        %523 = vmatpush.msra.mxu0 %v456
        %524 = vmatpush.msra.mxu0 %v455
        %525 = vmatpush.msra.mxu0 %v454
        %526 = vmatpush.msra.mxu0 %v453
        %527 = vmatpush.msra.mxu0 %v452
        %528 = vmatpush.msra.mxu0 %v451
        %529 = vmatmul.f32.gmra.mxu0 %v417
        %v530 = vpop.f32.mrf.mxu0
        %v531 = vadd.f32 %v508, %v530
        %532 = vmatmul.f32.gmra.mxu0 %v413
        %v533 = vpop.f32.mrf.mxu0
        %v534 = vadd.f32 %v511, %v533
        %535 = vdwg.mxu0
        %v536 = vld [vmem:[%s4 + $0x1] sm:$0x1]
        %v537 = vperm.slane %v536, 0
        %v538 = vadd.f32 %v531, %v537
        %v539 = vadd.f32 %v534, %v537
        %s540 = sld [smem:[#allocation4 + $0x1]]
        %vm541 = vcmp.gt.f32.partialorder %v538, 0.0
        %vm542 = vcmp.gt.f32.partialorder %v539, 0.0
        %v543 = vstv %s540
        %v544 = vmul.f32 %v543, %v538
        %v545 = vmul.f32 %v543, %v539
        %v546 = vsel %vm541, %v538, %v544
        %v547 = vsel %vm542, %v539, %v545
        %548 = vst [vmem:[#allocation2 + $0x8] sm:$0xff] %v546
        %549 = vst [vmem:[#allocation2 + $0x10] sm:$0xff] %v547
        %v550 = vld [vmem:[#allocation2 + $0xa] sm:$0xff]
        %v551 = vld [vmem:[#allocation2 + $0x12] sm:$0xff]
        %v552 = vld [vmem:[#allocation2 + $0x8] sm:$0xff]
        %v553 = vld [vmem:[#allocation2 + $0x10] sm:$0xff]
        %v554 = vld [vmem:[#allocation2 + $0x6] sm:$0xff]
        %v555 = vld [vmem:[#allocation2 + $0xe] sm:$0xff]
        %s556 = scalar_lea.vmem %s3, 768
        %v557 = vld [vmem:[%s556] sm:$0xff]
        %v558 = vld [vmem:[%s556 + $0x8] sm:$0xff]
        %v559 = vld [vmem:[%s556 + $0x10] sm:$0xff]
        %v560 = vld [vmem:[%s556 + $0x18] sm:$0xff]
        %v561 = vld [vmem:[%s556 + $0x20] sm:$0xff]
        %v562 = vld [vmem:[%s556 + $0x28] sm:$0xff]
        %v563 = vld [vmem:[%s556 + $0x30] sm:$0xff]
        %v564 = vld [vmem:[%s556 + $0x38] sm:$0xff]
        %v565 = vld [vmem:[%s556 + $0x40] sm:$0xff]
        %v566 = vld [vmem:[%s556 + $0x48] sm:$0xff]
        %v567 = vld [vmem:[%s556 + $0x50] sm:$0xff]
        %v568 = vld [vmem:[%s556 + $0x58] sm:$0xff]
        %v569 = vld [vmem:[%s556 + $0x60] sm:$0xff]
        %v570 = vld [vmem:[%s556 + $0x68] sm:$0xff]
        %v571 = vld [vmem:[%s556 + $0x70] sm:$0xff]
        %v572 = vld [vmem:[%s556 + $0x78] sm:$0xff]
        %v573 = vld [vmem:[%s556 + $0x80] sm:$0xff]
        %v574 = vld [vmem:[%s556 + $0x88] sm:$0xff]
        %v575 = vld [vmem:[%s556 + $0x90] sm:$0xff]
        %v576 = vld [vmem:[%s556 + $0x98] sm:$0xff]
        %v577 = vld [vmem:[%s556 + $0xa0] sm:$0xff]
        %v578 = vld [vmem:[%s556 + $0xa8] sm:$0xff]
        %v579 = vld [vmem:[%s556 + $0xb0] sm:$0xff]
        %v580 = vld [vmem:[%s556 + $0xb8] sm:$0xff]
        %v581 = vld [vmem:[%s556 + $0xc0] sm:$0xff]
        %v582 = vld [vmem:[%s556 + $0xc8] sm:$0xff]
        %v583 = vld [vmem:[%s556 + $0xd0] sm:$0xff]
        %v584 = vld [vmem:[%s556 + $0xd8] sm:$0xff]
        %v585 = vld [vmem:[%s556 + $0xe0] sm:$0xff]
        %v586 = vld [vmem:[%s556 + $0xe8] sm:$0xff]
        %v587 = vld [vmem:[%s556 + $0xf0] sm:$0xff]
        %v588 = vld [vmem:[%s556 + $0xf8] sm:$0xff]
        %v589 = vld [vmem:[%s556 + $0x100] sm:$0xff]
        %v590 = vld [vmem:[%s556 + $0x108] sm:$0xff]
        %v591 = vld [vmem:[%s556 + $0x110] sm:$0xff]
        %v592 = vld [vmem:[%s556 + $0x118] sm:$0xff]
        %v593 = vld [vmem:[%s556 + $0x120] sm:$0xff]
        %v594 = vld [vmem:[%s556 + $0x128] sm:$0xff]
        %v595 = vld [vmem:[%s556 + $0x130] sm:$0xff]
        %v596 = vld [vmem:[%s556 + $0x138] sm:$0xff]
        %v597 = vld [vmem:[%s556 + $0x140] sm:$0xff]
        %v598 = vld [vmem:[%s556 + $0x148] sm:$0xff]
        %v599 = vld [vmem:[%s556 + $0x150] sm:$0xff]
        %v600 = vld [vmem:[%s556 + $0x158] sm:$0xff]
        %v601 = vld [vmem:[%s556 + $0x160] sm:$0xff]
        %v602 = vld [vmem:[%s556 + $0x168] sm:$0xff]
        %v603 = vld [vmem:[%s556 + $0x170] sm:$0xff]
        %v604 = vld [vmem:[%s556 + $0x178] sm:$0xff]
        %605 = vmatpush.msra.mxu0 %v572
        %606 = vmatpush.msra.mxu0 %v571
        %607 = vmatpush.msra.mxu0 %v570
        %608 = vmatpush.msra.mxu0 %v569
        %609 = vmatpush.msra.mxu0 %v568
        %610 = vmatpush.msra.mxu0 %v567
        %611 = vmatpush.msra.mxu0 %v566
        %612 = vmatpush.msra.mxu0 %v565
        %613 = vmatpush.msra.mxu0 %v564
        %614 = vmatpush.msra.mxu0 %v563
        %615 = vmatpush.msra.mxu0 %v562
        %616 = vmatpush.msra.mxu0 %v561
        %617 = vmatpush.msra.mxu0 %v560
        %618 = vmatpush.msra.mxu0 %v559
        %619 = vmatpush.msra.mxu0 %v558
        %620 = vmatpush.msra.mxu0 %v557
        %621 = vmatmul.f32.gmra.mxu0 %v550
        %v622 = vpop.f32.mrf.mxu0
        %v623 = vadd.f32 0.0, %v622
        %624 = vmatmul.f32.gmra.mxu0 %v551
        %v625 = vpop.f32.mrf.mxu0
        %v626 = vadd.f32 0.0, %v625
        %627 = vdwg.mxu0
        %628 = vmatpush.msra.mxu0 %v588
        %629 = vmatpush.msra.mxu0 %v587
        %630 = vmatpush.msra.mxu0 %v586
        %631 = vmatpush.msra.mxu0 %v585
        %632 = vmatpush.msra.mxu0 %v584
        %633 = vmatpush.msra.mxu0 %v583
        %634 = vmatpush.msra.mxu0 %v582
        %635 = vmatpush.msra.mxu0 %v581
        %636 = vmatpush.msra.mxu0 %v580
        %637 = vmatpush.msra.mxu0 %v579
        %638 = vmatpush.msra.mxu0 %v578
        %639 = vmatpush.msra.mxu0 %v577
        %640 = vmatpush.msra.mxu0 %v576
        %641 = vmatpush.msra.mxu0 %v575
        %642 = vmatpush.msra.mxu0 %v574
        %643 = vmatpush.msra.mxu0 %v573
        %644 = vmatmul.f32.gmra.mxu0 %v552
        %v645 = vpop.f32.mrf.mxu0
        %v646 = vadd.f32 %v623, %v645
        %647 = vmatmul.f32.gmra.mxu0 %v553
        %v648 = vpop.f32.mrf.mxu0
        %v649 = vadd.f32 %v626, %v648
        %650 = vdwg.mxu0
        %651 = vmatpush.msra.mxu0 %v604
        %652 = vmatpush.msra.mxu0 %v603
        %653 = vmatpush.msra.mxu0 %v602
        %654 = vmatpush.msra.mxu0 %v601
        %655 = vmatpush.msra.mxu0 %v600
        %656 = vmatpush.msra.mxu0 %v599
        %657 = vmatpush.msra.mxu0 %v598
        %658 = vmatpush.msra.mxu0 %v597
        %659 = vmatpush.msra.mxu0 %v596
        %660 = vmatpush.msra.mxu0 %v595
        %661 = vmatpush.msra.mxu0 %v594
        %662 = vmatpush.msra.mxu0 %v593
        %663 = vmatpush.msra.mxu0 %v592
        %664 = vmatpush.msra.mxu0 %v591
        %665 = vmatpush.msra.mxu0 %v590
        %666 = vmatpush.msra.mxu0 %v589
        %667 = vmatmul.f32.gmra.mxu0 %v554
        %v668 = vpop.f32.mrf.mxu0
        %v669 = vadd.f32 %v646, %v668
        %670 = vmatmul.f32.gmra.mxu0 %v555
        %v671 = vpop.f32.mrf.mxu0
        %v672 = vadd.f32 %v649, %v671
        %673 = vdwg.mxu0
        %v674 = vld [vmem:[%s4 + $0x2] sm:$0x1]
        %v675 = vperm.slane %v674, 0
        %v676 = vadd.f32 %v669, %v675
        %v677 = vadd.f32 %v672, %v675
        %s678 = sld [smem:[#allocation4 + $0x2]]
        %vm679 = vcmp.gt.f32.partialorder %v676, 0.0
        %vm680 = vcmp.gt.f32.partialorder %v677, 0.0
        %v681 = vstv %s678
        %v682 = vmul.f32 %v681, %v676
        %v683 = vmul.f32 %v681, %v677
        %v684 = vsel %vm679, %v676, %v682
        %v685 = vsel %vm680, %v677, %v683
        %686 = vst [vmem:[#allocation2 + $0x8] sm:$0xff] %v684
        %687 = vst [vmem:[#allocation2 + $0x10] sm:$0xff] %v685
        %v688 = vld [vmem:[#allocation2 + $0x9] sm:$0xff]
        %v689 = vld [vmem:[#allocation2 + $0x11] sm:$0xff]
        %v690 = vld [vmem:[#allocation2 + $0x8] sm:$0xff]
        %v691 = vld [vmem:[#allocation2 + $0x10] sm:$0xff]
        %v692 = vld [vmem:[#allocation2 + $0x7] sm:$0xff]
        %v693 = vld [vmem:[#allocation2 + $0xf] sm:$0xff]
        %s694 = scalar_lea.vmem %s3, 1152
        %v695 = vld [vmem:[%s694] sm:$0xff]
        %v696 = vld [vmem:[%s694 + $0x8] sm:$0xff]
        %v697 = vld [vmem:[%s694 + $0x10] sm:$0xff]
        %v698 = vld [vmem:[%s694 + $0x18] sm:$0xff]
        %v699 = vld [vmem:[%s694 + $0x20] sm:$0xff]
        %v700 = vld [vmem:[%s694 + $0x28] sm:$0xff]
        %v701 = vld [vmem:[%s694 + $0x30] sm:$0xff]
        %v702 = vld [vmem:[%s694 + $0x38] sm:$0xff]
        %v703 = vld [vmem:[%s694 + $0x40] sm:$0xff]
        %v704 = vld [vmem:[%s694 + $0x48] sm:$0xff]
        %v705 = vld [vmem:[%s694 + $0x50] sm:$0xff]
        %v706 = vld [vmem:[%s694 + $0x58] sm:$0xff]
        %v707 = vld [vmem:[%s694 + $0x60] sm:$0xff]
        %v708 = vld [vmem:[%s694 + $0x68] sm:$0xff]
        %v709 = vld [vmem:[%s694 + $0x70] sm:$0xff]
        %v710 = vld [vmem:[%s694 + $0x78] sm:$0xff]
        %v711 = vld [vmem:[%s694 + $0x80] sm:$0xff]
        %v712 = vld [vmem:[%s694 + $0x88] sm:$0xff]
        %v713 = vld [vmem:[%s694 + $0x90] sm:$0xff]
        %v714 = vld [vmem:[%s694 + $0x98] sm:$0xff]
        %v715 = vld [vmem:[%s694 + $0xa0] sm:$0xff]
        %v716 = vld [vmem:[%s694 + $0xa8] sm:$0xff]
        %v717 = vld [vmem:[%s694 + $0xb0] sm:$0xff]
        %v718 = vld [vmem:[%s694 + $0xb8] sm:$0xff]
        %v719 = vld [vmem:[%s694 + $0xc0] sm:$0xff]
        %v720 = vld [vmem:[%s694 + $0xc8] sm:$0xff]
        %v721 = vld [vmem:[%s694 + $0xd0] sm:$0xff]
        %v722 = vld [vmem:[%s694 + $0xd8] sm:$0xff]
        %v723 = vld [vmem:[%s694 + $0xe0] sm:$0xff]
        %v724 = vld [vmem:[%s694 + $0xe8] sm:$0xff]
        %v725 = vld [vmem:[%s694 + $0xf0] sm:$0xff]
        %v726 = vld [vmem:[%s694 + $0xf8] sm:$0xff]
        %v727 = vld [vmem:[%s694 + $0x100] sm:$0xff]
        %v728 = vld [vmem:[%s694 + $0x108] sm:$0xff]
        %v729 = vld [vmem:[%s694 + $0x110] sm:$0xff]
        %v730 = vld [vmem:[%s694 + $0x118] sm:$0xff]
        %v731 = vld [vmem:[%s694 + $0x120] sm:$0xff]
        %v732 = vld [vmem:[%s694 + $0x128] sm:$0xff]
        %v733 = vld [vmem:[%s694 + $0x130] sm:$0xff]
        %v734 = vld [vmem:[%s694 + $0x138] sm:$0xff]
        %v735 = vld [vmem:[%s694 + $0x140] sm:$0xff]
        %v736 = vld [vmem:[%s694 + $0x148] sm:$0xff]
        %v737 = vld [vmem:[%s694 + $0x150] sm:$0xff]
        %v738 = vld [vmem:[%s694 + $0x158] sm:$0xff]
        %v739 = vld [vmem:[%s694 + $0x160] sm:$0xff]
        %v740 = vld [vmem:[%s694 + $0x168] sm:$0xff]
        %v741 = vld [vmem:[%s694 + $0x170] sm:$0xff]
        %v742 = vld [vmem:[%s694 + $0x178] sm:$0xff]
        %743 = vmatpush.msra.mxu0 %v710
        %744 = vmatpush.msra.mxu0 %v709
        %745 = vmatpush.msra.mxu0 %v708
        %746 = vmatpush.msra.mxu0 %v707
        %747 = vmatpush.msra.mxu0 %v706
        %748 = vmatpush.msra.mxu0 %v705
        %749 = vmatpush.msra.mxu0 %v704
        %750 = vmatpush.msra.mxu0 %v703
        %751 = vmatpush.msra.mxu0 %v702
        %752 = vmatpush.msra.mxu0 %v701
        %753 = vmatpush.msra.mxu0 %v700
        %754 = vmatpush.msra.mxu0 %v699
        %755 = vmatpush.msra.mxu0 %v698
        %756 = vmatpush.msra.mxu0 %v697
        %757 = vmatpush.msra.mxu0 %v696
        %758 = vmatpush.msra.mxu0 %v695
        %759 = vmatmul.f32.gmra.mxu0 %v688
        %v760 = vpop.f32.mrf.mxu0
        %v761 = vadd.f32 0.0, %v760
        %762 = vmatmul.f32.gmra.mxu0 %v689
        %v763 = vpop.f32.mrf.mxu0
        %v764 = vadd.f32 0.0, %v763
        %765 = vdwg.mxu0
        %766 = vmatpush.msra.mxu0 %v726
        %767 = vmatpush.msra.mxu0 %v725
        %768 = vmatpush.msra.mxu0 %v724
        %769 = vmatpush.msra.mxu0 %v723
        %770 = vmatpush.msra.mxu0 %v722
        %771 = vmatpush.msra.mxu0 %v721
        %772 = vmatpush.msra.mxu0 %v720
        %773 = vmatpush.msra.mxu0 %v719
        %774 = vmatpush.msra.mxu0 %v718
        %775 = vmatpush.msra.mxu0 %v717
        %776 = vmatpush.msra.mxu0 %v716
        %777 = vmatpush.msra.mxu0 %v715
        %778 = vmatpush.msra.mxu0 %v714
        %779 = vmatpush.msra.mxu0 %v713
        %780 = vmatpush.msra.mxu0 %v712
        %781 = vmatpush.msra.mxu0 %v711
        %782 = vmatmul.f32.gmra.mxu0 %v690
        %v783 = vpop.f32.mrf.mxu0
        %v784 = vadd.f32 %v761, %v783
        %785 = vmatmul.f32.gmra.mxu0 %v691
        %v786 = vpop.f32.mrf.mxu0
        %v787 = vadd.f32 %v764, %v786
        %788 = vdwg.mxu0
        %789 = vmatpush.msra.mxu0 %v742
        %790 = vmatpush.msra.mxu0 %v741
        %791 = vmatpush.msra.mxu0 %v740
        %792 = vmatpush.msra.mxu0 %v739
        %793 = vmatpush.msra.mxu0 %v738
        %794 = vmatpush.msra.mxu0 %v737
        %795 = vmatpush.msra.mxu0 %v736
        %796 = vmatpush.msra.mxu0 %v735
        %797 = vmatpush.msra.mxu0 %v734
        %798 = vmatpush.msra.mxu0 %v733
        %799 = vmatpush.msra.mxu0 %v732
        %800 = vmatpush.msra.mxu0 %v731
        %801 = vmatpush.msra.mxu0 %v730
        %802 = vmatpush.msra.mxu0 %v729
        %803 = vmatpush.msra.mxu0 %v728
        %804 = vmatpush.msra.mxu0 %v727
        %805 = vmatmul.f32.gmra.mxu0 %v692
        %v806 = vpop.f32.mrf.mxu0
        %v807 = vadd.f32 %v784, %v806
        %808 = vmatmul.f32.gmra.mxu0 %v693
        %v809 = vpop.f32.mrf.mxu0
        %v810 = vadd.f32 %v787, %v809
        %811 = vdwg.mxu0
        %v812 = vld [vmem:[%s4 + $0x3] sm:$0x1]
        %v813 = vperm.slane %v812, 0
        %v814 = vadd.f32 %v807, %v813
        %v815 = vadd.f32 %v810, %v813
        %s816 = sld [smem:[#allocation4 + $0x3]]
        %vm817 = vcmp.gt.f32.partialorder %v814, 0.0
        %vm818 = vcmp.gt.f32.partialorder %v815, 0.0
        %v819 = vstv %s816
        %v820 = vmul.f32 %v819, %v814
        %v821 = vmul.f32 %v819, %v815
        %v822 = vsel %vm817, %v814, %v820
        %v823 = vsel %vm818, %v815, %v821
        %824 = vst [vmem:[#allocation2 + $0x8] sm:$0xff] %v822
        %825 = vst [vmem:[#allocation2 + $0x10] sm:$0xff] %v823
        %v826 = vld [vmem:[#allocation2 + $0x8] sm:$0xff]
        %v827 = vld [vmem:[#allocation2 + $0x10] sm:$0xff]
        %v828 = vld [vmem:[%s5] sm:$0xff]
        %v829 = vld [vmem:[%s5 + $0x8] sm:$0xff]
        %v830 = vld [vmem:[%s5 + $0x10] sm:$0xff]
        %v831 = vld [vmem:[%s5 + $0x18] sm:$0xff]
        %v832 = vld [vmem:[%s5 + $0x20] sm:$0xff]
        %v833 = vld [vmem:[%s5 + $0x28] sm:$0xff]
        %v834 = vld [vmem:[%s5 + $0x30] sm:$0xff]
        %v835 = vld [vmem:[%s5 + $0x38] sm:$0xff]
        %v836 = vld [vmem:[%s5 + $0x40] sm:$0xff]
        %v837 = vld [vmem:[%s5 + $0x48] sm:$0xff]
        %v838 = vld [vmem:[%s5 + $0x50] sm:$0xff]
        %v839 = vld [vmem:[%s5 + $0x58] sm:$0xff]
        %v840 = vld [vmem:[%s5 + $0x60] sm:$0xff]
        %v841 = vld [vmem:[%s5 + $0x68] sm:$0xff]
        %v842 = vld [vmem:[%s5 + $0x70] sm:$0xff]
        %v843 = vld [vmem:[%s5 + $0x78] sm:$0xff]
        %844 = vmatpush.msra.mxu0 %v843
        %845 = vmatpush.msra.mxu0 %v842
        %846 = vmatpush.msra.mxu0 %v841
        %847 = vmatpush.msra.mxu0 %v840
        %848 = vmatpush.msra.mxu0 %v839
        %849 = vmatpush.msra.mxu0 %v838
        %850 = vmatpush.msra.mxu0 %v837
        %851 = vmatpush.msra.mxu0 %v836
        %852 = vmatpush.msra.mxu0 %v835
        %853 = vmatpush.msra.mxu0 %v834
        %854 = vmatpush.msra.mxu0 %v833
        %855 = vmatpush.msra.mxu0 %v832
        %856 = vmatpush.msra.mxu0 %v831
        %857 = vmatpush.msra.mxu0 %v830
        %858 = vmatpush.msra.mxu0 %v829
        %859 = vmatpush.msra.mxu0 %v828
        %860 = vmatmul.f32.gmra.mxu0 %v826
        %v861 = vpop.f32.mrf.mxu0
        %v862 = vadd.f32 0.0, %v861
        %863 = vmatmul.f32.gmra.mxu0 %v827
        %v864 = vpop.f32.mrf.mxu0
        %v865 = vadd.f32 0.0, %v864
        %866 = vdwg.mxu0
        %s867 = sld [smem:[#allocation3]]
        %v868 = vstv %s867
        %v869 = vadd.f32 %v868, 0.0
        %vm870 = vcmask 64512
        %871 = vst.msk [vmem:[%s266] sm:$0xff] %vm870, %v869
        %872 = vst.msk [vmem:[%s266 + $0x8] sm:$0xff] %vm870, %v869
        %vm873 = vcmask 57344
        %874 = vst.msk [vmem:[%s266 + $0x10] sm:$0x1] %vm873, %v869
        %v875 = vld [vmem:[%s266] sm:$0xff]
        %v876 = vld [vmem:[%s266 + $0x8] sm:$0xff]
        %v877 = vadd.f32 %v875, %v862
        %v878 = vadd.f32 %v876, %v865
        %879 = vst.msk [vmem:[%s266] sm:$0xff] %vm870, %v877
        %880 = vst.msk [vmem:[%s266 + $0x8] sm:$0xff] %vm870, %v878
        %v881 = vld [vmem:[%s266 + $0x1] sm:$0xff]
        %v882 = vld [vmem:[%s266 + $0x9] sm:$0xff]
        %885 = vrot.lane.b32.xlu0 %v862, 120
        %v886 = vpop.permute.xlu0 %885
        %887 = vrot.lane.b32.xlu0 %v865, 120
        %v888 = vpop.permute.xlu0 %887
        %v891 = vadd.f32 %v881, %v886
        %v892 = vadd.f32 %v882, %v888
        %893 = vst.msk [vmem:[%s266 + $0x1] sm:$0xff] %vm870, %v891
        %894 = vst.msk [vmem:[%s266 + $0x9] sm:$0xff] %vm870, %v892
        %p895 = scmp.lt.s32.totalorder %s19, 1
        %s896 = scalar_select %p895, %s19, 1
        %s897 = smul.addr %s896, 3
        %s898 = smul.addr %s897, 8
        %s899 = scalar_lea.vmem %s6, %s898
        // Predicated region
        $region49: #{decoder_forward.1} parent=43 // pred_check
          %p900 = pneg %p168
        $region50: #{decoder_forward.1} parent=43 // pred_check_branch
          %902 = sbr.rel (%p900) target = $region52
        $region51: #{decoder_forward.1} parent=43 // pred_region
          _
        $region52: #{decoder_forward.1} parent=43 // pred_fallthru
          _
      $region44: #{decoder_forward.1} parent=5 // pred_fallthru
        _
      %p903 = scmp.le.s32.totalorder 2, %s14
      // Predicated region
      $region53: #{decoder_forward.1} parent=5 // pred_check
        %p904 = pneg %p903
      $region54: #{decoder_forward.1} parent=5 // pred_check_branch
        %906 = sbr.rel (%p904) target = $region56
      $region55: #{decoder_forward.1} parent=5 // pred_region
        %s907 = ssub.s32 %s14, 2
        // Predicated region
        $region57: #{decoder_forward.1} parent=55 // pred_check
          %p908 = pneg %p174
        $region58: #{decoder_forward.1} parent=55 // pred_check_branch
          %910 = sbr.rel (%p908) target = $region60
        $region59: #{decoder_forward.1} parent=55 // pred_region
          %p911 = scmp.lt.s32.totalorder %s20, 1
          %s912 = scalar_select %p911, %s20, 1
          %s913 = smul.addr %s912, 3
          %s914 = smul.addr %s913, 8
          %s915 = scalar_lea.vmem %s6, %s914
        $region60: #{decoder_forward.1} parent=55 // pred_fallthru
          _
      $region56: #{decoder_forward.1} parent=5 // pred_fallthru
        _
    $region6: #{decoder_forward.1} parent=1 // loop_footer
      %s18 = sadd.s32 1, %s14
    $region7: #{decoder_forward.1} parent=1 // loop_footer_branch
      %13 = sbr.rel target = $region3
    $region8: #{decoder_forward.1} parent=1 // loop_exit
      _
    %916 = vsyncpa [#allocation5], 1
    %s917 = scalar_lea.sflag [#allocation5], 1
    %918 = vsyncpa %s917, 1

</llo_original>
